<compile_context>
chip_gen: v7x
topology: tpu7x:2x2x1
jax: 0.10.0
libtpu: 0.0.40
codegen_flags: <defaults>
</compile_context>

<pallas_src>
import functools

import jax
import jax.numpy as jnp
from jax.experimental import pallas as pl
from jax.experimental.pallas import tpu as pltpu


def _round_up(v, m):
    return ((v + m - 1) // m) * m


def fused_gin_kernel(a_ref, x_ref, *args,
                     num_layers, n_real, n_pad, use_pair_norm):
    """Whole forward pass of ClassificationGINFromPYG in one kernel.

    args = [w1_0, b1_0, w2_0, b2_0, ..., w1_{L-1}, b1_{L-1}, w2_{L-1}, b2_{L-1}, o_ref]
    Per layer (PyG GINConv, eps=0):  h = MLP((A + I) @ h)
    then ReLU (all but last layer), PairNorm 'PN-SI' (scale=1), and a final sigmoid.
    All feature dims are zero-padded to 128 lanes; padded columns stay exactly 0
    through every layer, so PairNorm row norms match the unpadded computation.
    """
    o_ref = args[-1]
    layer_refs = args[:-1]

    a = a_ref[...]                               # (n_pad, n_pad) bf16
    h = x_ref[...].astype(jnp.float32)           # (n_pad, d_pad) f32 working copy

    needs_row_mask = (n_pad != n_real)
    if needs_row_mask:
        row_ids = jax.lax.broadcasted_iota(jnp.int32, (n_pad, 1), 0)
        row_mask = (row_ids < n_real).astype(jnp.float32)
    inv_n = 1.0 / float(n_real)

    for i in range(num_layers):
        w1 = layer_refs[4 * i][...]              # bf16 (in_p, out_p)
        b1 = layer_refs[4 * i + 1][...]          # f32  (1, out_p)
        w2 = layer_refs[4 * i + 2][...]          # bf16 (out_p, out_p)
        b2 = layer_refs[4 * i + 3][...]          # f32  (1, out_p)

        # TODO(synk): nn.Dropout(p=0.01) before layers i != 0 is treated as
        #             identity (eval-mode semantics).

        # GIN aggregation: (A + I) @ h   (self-loop already folded into a_hat)
        agg = jnp.dot(a, h.astype(jnp.bfloat16),
                      preferred_element_type=jnp.float32)

        # MLP: Linear -> ReLU -> Linear  (bf16 operands, f32 accumulation)
        t = jnp.dot(agg.astype(jnp.bfloat16), w1,
                    preferred_element_type=jnp.float32) + b1
        t = jnp.maximum(t, 0.0)
        t = jnp.dot(t.astype(jnp.bfloat16), w2,
                    preferred_element_type=jnp.float32) + b2

        if i != num_layers - 1:                  # F.relu after all but last layer
            t = jnp.maximum(t, 0.0)

        if needs_row_mask:                       # zero padded node rows (bias leak)
            t = t * row_mask

        if use_pair_norm:                        # PairNorm 'PN-SI', scale = 1
            col_mean = jnp.sum(t, axis=0, keepdims=True) * inv_n
            t = t - col_mean
            t = t * jax.lax.rsqrt(1e-6 + jnp.sum(t * t, axis=1, keepdims=True))
            if needs_row_mask:
                t = t * row_mask

        h = t

    # final torch.sigmoid — exp on EUP + approximate reciprocal (EUP slot)
    h = pl.reciprocal(1.0 + jnp.exp(-h), approx=True)
    o_ref[...] = h.astype(o_ref.dtype)


def classification_gin_forward(x, edge_index, params, num_layers, use_pair_norm=True):
    """Forward pass of ClassificationGINFromPYG.
       x: (N, D) float32 node features
       edge_index: (2, E) int32, row 0 = source nodes, row 1 = target nodes."""
    n, d_in = x.shape
    n_pad = _round_up(n, 8)
    d_in_pad = _round_up(d_in, 128)

    # Glue: dense adjacency with GIN self term, A_hat[dst, src] += 1, plus I.
    a = jnp.zeros((n, n), jnp.float32).at[edge_index[1], edge_index[0]].add(1.0)
    a_hat = a + jnp.eye(n, dtype=jnp.float32)
    a_hat = jnp.pad(a_hat, ((0, n_pad - n), (0, n_pad - n))).astype(jnp.bfloat16)

    x_pad = jnp.pad(x, ((0, n_pad - n), (0, d_in_pad - d_in))).astype(jnp.bfloat16)

    flat_inputs = [a_hat, x_pad]
    for (w1, b1, w2, b2) in params:
        in_dim, out_dim = w1.shape
        in_p, out_p = _round_up(in_dim, 128), _round_up(out_dim, 128)
        flat_inputs.append(
            jnp.pad(w1, ((0, in_p - in_dim), (0, out_p - out_dim))).astype(jnp.bfloat16))
        flat_inputs.append(
            jnp.pad(b1.reshape(1, -1), ((0, 0), (0, out_p - out_dim))).astype(jnp.float32))
        flat_inputs.append(
            jnp.pad(w2, ((0, out_dim - out_dim), (0, out_p - out_dim))).astype(jnp.bfloat16)
            if False else
            jnp.pad(w2, ((0, out_p - out_dim), (0, out_p - out_dim))).astype(jnp.bfloat16))
        flat_inputs.append(
            jnp.pad(b2.reshape(1, -1), ((0, 0), (0, out_p - out_dim))).astype(jnp.float32))

    d_out = params[-1][2].shape[1]
    d_out_pad = _round_up(d_out, 128)

    kernel = functools.partial(
        fused_gin_kernel,
        num_layers=num_layers,
        n_real=n,
        n_pad=n_pad,
        use_pair_norm=use_pair_norm,
    )

    # Scoped VMEM budget: inputs + output + generous headroom, capped below v7x's
    # 64 MiB physical VMEM (v5e default scoped limit is only 16 MiB).
    in_bytes = sum(int(arr.size) * arr.dtype.itemsize for arr in flat_inputs)
    out_bytes = n_pad * d_out_pad * 4
    vmem_bytes = int(min(2 * (in_bytes + out_bytes) + (8 << 20), 48 * 1024 * 1024))

    out = pl.pallas_call(
        kernel,
        out_shape=jax.ShapeDtypeStruct((n_pad, d_out_pad), jnp.float32),
        in_specs=[pl.BlockSpec(memory_space=pltpu.MemorySpace.VMEM)] * len(flat_inputs),
        out_specs=pl.BlockSpec(memory_space=pltpu.MemorySpace.VMEM),
        compiler_params=pltpu.CompilerParams(vmem_limit_bytes=vmem_bytes),
    )(*flat_inputs)

    return out[:n, :d_out]


def init_params(key, input_dim, hidden, num_class, num_layers):
    """Deterministic parameter init matching the module's shapes:
       layer i MLP = Linear(in_i, out_i) -> ReLU -> Linear(out_i, out_i)."""
    params = []
    for i in range(num_layers):
        in_dim = input_dim if i == 0 else hidden
        out_dim = num_class if i == num_layers - 1 else hidden
        key, k1, k2, k3, k4 = jax.random.split(key, 5)
        w1 = (jax.random.normal(k1, (in_dim, out_dim), jnp.float32)
              * (1.0 / jnp.sqrt(in_dim)))
        b1 = jax.random.normal(k2, (out_dim,), jnp.float32) * 0.01
        w2 = (jax.random.normal(k3, (out_dim, out_dim), jnp.float32)
              * (1.0 / jnp.sqrt(out_dim)))
        b2 = jax.random.normal(k4, (out_dim,), jnp.float32) * 0.01
        params.append((w1, b1, w2, b2))
    return params


if __name__ == "__main__":
    key = jax.random.PRNGKey(0)
    kx, ks, kd, kp = jax.random.split(key, 4)

    # Small, module-consistent shapes: N nodes, E edges, feature dims.
    N, E = 16, 48
    INPUT_DIM, HIDDEN, NUM_CLASS, NUM_LAYERS = 64, 32, 7, 3

    x = jax.random.normal(kx, (N, INPUT_DIM), jnp.float32)
    src = jax.random.randint(ks, (E,), 0, N, dtype=jnp.int32)
    dst = jax.random.randint(kd, (E,), 0, N, dtype=jnp.int32)
    edge_index = jnp.stack([src, dst])  # (2, E)

    params = init_params(kp, INPUT_DIM, HIDDEN, NUM_CLASS, NUM_LAYERS)

    out = classification_gin_forward(x, edge_index, params, NUM_LAYERS, use_pair_norm=True)
    out = jax.block_until_ready(out)
    assert out.shape == (N, NUM_CLASS)
    assert bool(jnp.all(jnp.isfinite(out)))
    print("KERNEL_OK")
</pallas_src>

<mosaic_0001>
module attributes {stable_mosaic.version = 11 : i64} {
  func.func @fused_gin_kernel(%arg0: memref<16x16xbf16, #tpu.memory_space<vmem>>, %arg1: memref<16x128xbf16, #tpu.memory_space<vmem>>, %arg2: memref<128x128xbf16, #tpu.memory_space<vmem>>, %arg3: memref<1x128xf32, #tpu.memory_space<vmem>>, %arg4: memref<128x128xbf16, #tpu.memory_space<vmem>>, %arg5: memref<1x128xf32, #tpu.memory_space<vmem>>, %arg6: memref<128x128xbf16, #tpu.memory_space<vmem>>, %arg7: memref<1x128xf32, #tpu.memory_space<vmem>>, %arg8: memref<128x128xbf16, #tpu.memory_space<vmem>>, %arg9: memref<1x128xf32, #tpu.memory_space<vmem>>, %arg10: memref<128x128xbf16, #tpu.memory_space<vmem>>, %arg11: memref<1x128xf32, #tpu.memory_space<vmem>>, %arg12: memref<128x128xbf16, #tpu.memory_space<vmem>>, %arg13: memref<1x128xf32, #tpu.memory_space<vmem>>, %arg14: memref<16x128xf32, #tpu.memory_space<vmem>>) attributes {dimension_semantics = [], scalar_prefetch = 0 : i64, scratch_operands = 0 : i64, tpu.core_type = #tpu.core_type<tc>} {
    %c0 = arith.constant 0 : index
    %c0_0 = arith.constant 0 : index
    %0 = vector.load %arg0[%c0, %c0_0] : memref<16x16xbf16, #tpu.memory_space<vmem>>, vector<16x16xbf16>
    %c0_1 = arith.constant 0 : index
    %c0_2 = arith.constant 0 : index
    %1 = vector.load %arg1[%c0_1, %c0_2] : memref<16x128xbf16, #tpu.memory_space<vmem>>, vector<16x128xbf16>
    %2 = arith.extf %1 : vector<16x128xbf16> to vector<16x128xf32>
    %c0_3 = arith.constant 0 : index
    %c0_4 = arith.constant 0 : index
    %3 = vector.load %arg2[%c0_3, %c0_4] : memref<128x128xbf16, #tpu.memory_space<vmem>>, vector<128x128xbf16>
    %c0_5 = arith.constant 0 : index
    %c0_6 = arith.constant 0 : index
    %4 = vector.load %arg3[%c0_5, %c0_6] : memref<1x128xf32, #tpu.memory_space<vmem>>, vector<1x128xf32>
    %c0_7 = arith.constant 0 : index
    %c0_8 = arith.constant 0 : index
    %5 = vector.load %arg4[%c0_7, %c0_8] : memref<128x128xbf16, #tpu.memory_space<vmem>>, vector<128x128xbf16>
    %c0_9 = arith.constant 0 : index
    %c0_10 = arith.constant 0 : index
    %6 = vector.load %arg5[%c0_9, %c0_10] : memref<1x128xf32, #tpu.memory_space<vmem>>, vector<1x128xf32>
    %7 = arith.truncf %2 : vector<16x128xf32> to vector<16x128xbf16>
    %cst = arith.constant dense<0.000000e+00> : vector<16x128xf32>
    %8 = tpu.matmul %0, %7, %cst {dimension_numbers = #tpu.dot_dimension_numbers<[1], [0], [0], [1], [0, 0, 1, 1], [], []>} : vector<16x16xbf16>, vector<16x128xbf16>, vector<16x128xf32> -> vector<16x128xf32>
    %9 = arith.truncf %8 : vector<16x128xf32> to vector<16x128xbf16>
    %cst_11 = arith.constant dense<0.000000e+00> : vector<16x128xf32>
    %10 = tpu.matmul %9, %3, %cst_11 {dimension_numbers = #tpu.dot_dimension_numbers<[1], [0], [0], [1], [0, 0, 1, 1], [], []>} : vector<16x128xbf16>, vector<128x128xbf16>, vector<16x128xf32> -> vector<16x128xf32>
    %11 = vector.broadcast %4 : vector<1x128xf32> to vector<16x128xf32>
    %12 = arith.addf %10, %11 : vector<16x128xf32>
    %cst_12 = arith.constant 0.000000e+00 : f32
    %13 = vector.broadcast %cst_12 : f32 to vector<16x128xf32>
    %14 = arith.maximumf %12, %13 : vector<16x128xf32>
    %15 = arith.truncf %14 : vector<16x128xf32> to vector<16x128xbf16>
    %cst_13 = arith.constant dense<0.000000e+00> : vector<16x128xf32>
    %16 = tpu.matmul %15, %5, %cst_13 {dimension_numbers = #tpu.dot_dimension_numbers<[1], [0], [0], [1], [0, 0, 1, 1], [], []>} : vector<16x128xbf16>, vector<128x128xbf16>, vector<16x128xf32> -> vector<16x128xf32>
    %17 = vector.broadcast %6 : vector<1x128xf32> to vector<16x128xf32>
    %18 = arith.addf %16, %17 : vector<16x128xf32>
    %cst_14 = arith.constant 0.000000e+00 : f32
    %19 = vector.broadcast %cst_14 : f32 to vector<16x128xf32>
    %20 = arith.maximumf %18, %19 : vector<16x128xf32>
    %cst_15 = arith.constant dense<0.000000e+00> : vector<128xf32>
    %21 = vector.multi_reduction <add>, %20, %cst_15 [0] : vector<16x128xf32> to vector<128xf32>
    %22 = vector.shape_cast %21 : vector<128xf32> to vector<1x128xf32>
    %cst_16 = arith.constant 6.250000e-02 : f32
    %23 = vector.broadcast %cst_16 : f32 to vector<1x128xf32>
    %24 = arith.mulf %22, %23 : vector<1x128xf32>
    %25 = vector.broadcast %24 : vector<1x128xf32> to vector<16x128xf32>
    %26 = arith.subf %20, %25 : vector<16x128xf32>
    %27 = arith.mulf %26, %26 : vector<16x128xf32>
    %cst_17 = arith.constant dense<0.000000e+00> : vector<16xf32>
    %28 = vector.multi_reduction <add>, %27, %cst_17 [1] : vector<16x128xf32> to vector<16xf32>
    %29 = vector.shape_cast %28 : vector<16xf32> to vector<16x1xf32>
    %cst_18 = arith.constant 9.99999997E-7 : f32
    %30 = vector.broadcast %cst_18 : f32 to vector<16x1xf32>
    %31 = arith.addf %30, %29 : vector<16x1xf32>
    %32 = math.rsqrt %31 : vector<16x1xf32>
    %33 = vector.broadcast %32 : vector<16x1xf32> to vector<16x128xf32>
    %34 = arith.mulf %26, %33 : vector<16x128xf32>
    %c0_19 = arith.constant 0 : index
    %c0_20 = arith.constant 0 : index
    %35 = vector.load %arg6[%c0_19, %c0_20] : memref<128x128xbf16, #tpu.memory_space<vmem>>, vector<128x128xbf16>
    %c0_21 = arith.constant 0 : index
    %c0_22 = arith.constant 0 : index
    %36 = vector.load %arg7[%c0_21, %c0_22] : memref<1x128xf32, #tpu.memory_space<vmem>>, vector<1x128xf32>
    %c0_23 = arith.constant 0 : index
    %c0_24 = arith.constant 0 : index
    %37 = vector.load %arg8[%c0_23, %c0_24] : memref<128x128xbf16, #tpu.memory_space<vmem>>, vector<128x128xbf16>
    %c0_25 = arith.constant 0 : index
    %c0_26 = arith.constant 0 : index
    %38 = vector.load %arg9[%c0_25, %c0_26] : memref<1x128xf32, #tpu.memory_space<vmem>>, vector<1x128xf32>
    %39 = arith.truncf %34 : vector<16x128xf32> to vector<16x128xbf16>
    %cst_27 = arith.constant dense<0.000000e+00> : vector<16x128xf32>
    %40 = tpu.matmul %0, %39, %cst_27 {dimension_numbers = #tpu.dot_dimension_numbers<[1], [0], [0], [1], [0, 0, 1, 1], [], []>} : vector<16x16xbf16>, vector<16x128xbf16>, vector<16x128xf32> -> vector<16x128xf32>
    %41 = arith.truncf %40 : vector<16x128xf32> to vector<16x128xbf16>
    %cst_28 = arith.constant dense<0.000000e+00> : vector<16x128xf32>
    %42 = tpu.matmul %41, %35, %cst_28 {dimension_numbers = #tpu.dot_dimension_numbers<[1], [0], [0], [1], [0, 0, 1, 1], [], []>} : vector<16x128xbf16>, vector<128x128xbf16>, vector<16x128xf32> -> vector<16x128xf32>
    %43 = vector.broadcast %36 : vector<1x128xf32> to vector<16x128xf32>
    %44 = arith.addf %42, %43 : vector<16x128xf32>
    %cst_29 = arith.constant 0.000000e+00 : f32
    %45 = vector.broadcast %cst_29 : f32 to vector<16x128xf32>
    %46 = arith.maximumf %44, %45 : vector<16x128xf32>
    %47 = arith.truncf %46 : vector<16x128xf32> to vector<16x128xbf16>
    %cst_30 = arith.constant dense<0.000000e+00> : vector<16x128xf32>
    %48 = tpu.matmul %47, %37, %cst_30 {dimension_numbers = #tpu.dot_dimension_numbers<[1], [0], [0], [1], [0, 0, 1, 1], [], []>} : vector<16x128xbf16>, vector<128x128xbf16>, vector<16x128xf32> -> vector<16x128xf32>
    %49 = vector.broadcast %38 : vector<1x128xf32> to vector<16x128xf32>
    %50 = arith.addf %48, %49 : vector<16x128xf32>
    %cst_31 = arith.constant 0.000000e+00 : f32
    %51 = vector.broadcast %cst_31 : f32 to vector<16x128xf32>
    %52 = arith.maximumf %50, %51 : vector<16x128xf32>
    %cst_32 = arith.constant dense<0.000000e+00> : vector<128xf32>
    %53 = vector.multi_reduction <add>, %52, %cst_32 [0] : vector<16x128xf32> to vector<128xf32>
    %54 = vector.shape_cast %53 : vector<128xf32> to vector<1x128xf32>
    %cst_33 = arith.constant 6.250000e-02 : f32
    %55 = vector.broadcast %cst_33 : f32 to vector<1x128xf32>
    %56 = arith.mulf %54, %55 : vector<1x128xf32>
    %57 = vector.broadcast %56 : vector<1x128xf32> to vector<16x128xf32>
    %58 = arith.subf %52, %57 : vector<16x128xf32>
    %59 = arith.mulf %58, %58 : vector<16x128xf32>
    %cst_34 = arith.constant dense<0.000000e+00> : vector<16xf32>
    %60 = vector.multi_reduction <add>, %59, %cst_34 [1] : vector<16x128xf32> to vector<16xf32>
    %61 = vector.shape_cast %60 : vector<16xf32> to vector<16x1xf32>
    %cst_35 = arith.constant 9.99999997E-7 : f32
    %62 = vector.broadcast %cst_35 : f32 to vector<16x1xf32>
    %63 = arith.addf %62, %61 : vector<16x1xf32>
    %64 = math.rsqrt %63 : vector<16x1xf32>
    %65 = vector.broadcast %64 : vector<16x1xf32> to vector<16x128xf32>
    %66 = arith.mulf %58, %65 : vector<16x128xf32>
    %c0_36 = arith.constant 0 : index
    %c0_37 = arith.constant 0 : index
    %67 = vector.load %arg10[%c0_36, %c0_37] : memref<128x128xbf16, #tpu.memory_space<vmem>>, vector<128x128xbf16>
    %c0_38 = arith.constant 0 : index
    %c0_39 = arith.constant 0 : index
    %68 = vector.load %arg11[%c0_38, %c0_39] : memref<1x128xf32, #tpu.memory_space<vmem>>, vector<1x128xf32>
    %c0_40 = arith.constant 0 : index
    %c0_41 = arith.constant 0 : index
    %69 = vector.load %arg12[%c0_40, %c0_41] : memref<128x128xbf16, #tpu.memory_space<vmem>>, vector<128x128xbf16>
    %c0_42 = arith.constant 0 : index
    %c0_43 = arith.constant 0 : index
    %70 = vector.load %arg13[%c0_42, %c0_43] : memref<1x128xf32, #tpu.memory_space<vmem>>, vector<1x128xf32>
    %71 = arith.truncf %66 : vector<16x128xf32> to vector<16x128xbf16>
    %cst_44 = arith.constant dense<0.000000e+00> : vector<16x128xf32>
    %72 = tpu.matmul %0, %71, %cst_44 {dimension_numbers = #tpu.dot_dimension_numbers<[1], [0], [0], [1], [0, 0, 1, 1], [], []>} : vector<16x16xbf16>, vector<16x128xbf16>, vector<16x128xf32> -> vector<16x128xf32>
    %73 = arith.truncf %72 : vector<16x128xf32> to vector<16x128xbf16>
    %cst_45 = arith.constant dense<0.000000e+00> : vector<16x128xf32>
    %74 = tpu.matmul %73, %67, %cst_45 {dimension_numbers = #tpu.dot_dimension_numbers<[1], [0], [0], [1], [0, 0, 1, 1], [], []>} : vector<16x128xbf16>, vector<128x128xbf16>, vector<16x128xf32> -> vector<16x128xf32>
    %75 = vector.broadcast %68 : vector<1x128xf32> to vector<16x128xf32>
    %76 = arith.addf %74, %75 : vector<16x128xf32>
    %cst_46 = arith.constant 0.000000e+00 : f32
    %77 = vector.broadcast %cst_46 : f32 to vector<16x128xf32>
    %78 = arith.maximumf %76, %77 : vector<16x128xf32>
    %79 = arith.truncf %78 : vector<16x128xf32> to vector<16x128xbf16>
    %cst_47 = arith.constant dense<0.000000e+00> : vector<16x128xf32>
    %80 = tpu.matmul %79, %69, %cst_47 {dimension_numbers = #tpu.dot_dimension_numbers<[1], [0], [0], [1], [0, 0, 1, 1], [], []>} : vector<16x128xbf16>, vector<128x128xbf16>, vector<16x128xf32> -> vector<16x128xf32>
    %81 = vector.broadcast %70 : vector<1x128xf32> to vector<16x128xf32>
    %82 = arith.addf %80, %81 : vector<16x128xf32>
    %cst_48 = arith.constant dense<0.000000e+00> : vector<128xf32>
    %83 = vector.multi_reduction <add>, %82, %cst_48 [0] : vector<16x128xf32> to vector<128xf32>
    %84 = vector.shape_cast %83 : vector<128xf32> to vector<1x128xf32>
    %cst_49 = arith.constant 6.250000e-02 : f32
    %85 = vector.broadcast %cst_49 : f32 to vector<1x128xf32>
    %86 = arith.mulf %84, %85 : vector<1x128xf32>
    %87 = vector.broadcast %86 : vector<1x128xf32> to vector<16x128xf32>
    %88 = arith.subf %82, %87 : vector<16x128xf32>
    %89 = arith.mulf %88, %88 : vector<16x128xf32>
    %cst_50 = arith.constant dense<0.000000e+00> : vector<16xf32>
    %90 = vector.multi_reduction <add>, %89, %cst_50 [1] : vector<16x128xf32> to vector<16xf32>
    %91 = vector.shape_cast %90 : vector<16xf32> to vector<16x1xf32>
    %cst_51 = arith.constant 9.99999997E-7 : f32
    %92 = vector.broadcast %cst_51 : f32 to vector<16x1xf32>
    %93 = arith.addf %92, %91 : vector<16x1xf32>
    %94 = math.rsqrt %93 : vector<16x1xf32>
    %95 = vector.broadcast %94 : vector<16x1xf32> to vector<16x128xf32>
    %96 = arith.mulf %88, %95 : vector<16x128xf32>
    %cst_52 = arith.constant 0.000000e+00 : f32
    %97 = vector.broadcast %cst_52 : f32 to vector<16x128xf32>
    %98 = arith.subf %97, %96 : vector<16x128xf32>
    %99 = math.exp %98 : vector<16x128xf32>
    %cst_53 = arith.constant 1.000000e+00 : f32
    %100 = vector.broadcast %cst_53 : f32 to vector<16x128xf32>
    %101 = arith.addf %100, %99 : vector<16x128xf32>
    %102 = tpu.reciprocal %101 {approx = true} : vector<16x128xf32> -> vector<16x128xf32>
    %c0_54 = arith.constant 0 : index
    %c0_55 = arith.constant 0 : index
    %103 = vector.load %arg14[%c0_54, %c0_55] : memref<16x128xf32, #tpu.memory_space<vmem>>, vector<16x128xf32>
    tpu.vector_store %arg14[%c0_54, %c0_55], %102 {strides = array<i32>} : memref<16x128xf32, #tpu.memory_space<vmem>>, vector<16x128xf32>,
    return
  }
}

</mosaic_0001>

<llo_original>
// kernel: tpu_custom_call.1
$region0: #{tpu_custom_call.1}
  #allocation0 [shape = 'u32[]', space=smem, size = 0x4, offset = 0x4, fixed_abs, tag = 'smem constant byte address 0x4 - core index']
  #allocation1 [shape = 'u32[144,128]{1,0:T(1,128)}', space=vmem, size = 0x12000, scoped, tag = 'internal scratch']
  %s0 = inlined_call_operand.hbm [shape: bf16[16,16], index: 0, kind: input, shape index: {}]
  %s1 = inlined_call_operand.hbm [shape: bf16[16,128], index: 1, kind: input, shape index: {}]
  %s2 = inlined_call_operand.hbm [shape: bf16[128,128], index: 2, kind: input, shape index: {}]
  %s3 = inlined_call_operand.vmem [shape: f32[1,128], index: 3, kind: input, shape index: {}]
  %s4 = inlined_call_operand.hbm [shape: bf16[128,128], index: 4, kind: input, shape index: {}]
  %s5 = inlined_call_operand.vmem [shape: f32[1,128], index: 5, kind: input, shape index: {}]
  %s6 = inlined_call_operand.hbm [shape: bf16[128,128], index: 6, kind: input, shape index: {}]
  %s7 = inlined_call_operand.vmem [shape: f32[1,128], index: 7, kind: input, shape index: {}]
  %s8 = inlined_call_operand.hbm [shape: bf16[128,128], index: 8, kind: input, shape index: {}]
  %s9 = inlined_call_operand.vmem [shape: f32[1,128], index: 9, kind: input, shape index: {}]
  %s10 = inlined_call_operand.hbm [shape: bf16[128,128], index: 10, kind: input, shape index: {}]
  %s11 = inlined_call_operand.vmem [shape: f32[1,128], index: 11, kind: input, shape index: {}]
  %s12 = inlined_call_operand.hbm [shape: bf16[128,128], index: 12, kind: input, shape index: {}]
  %s13 = inlined_call_operand.vmem [shape: f32[1,128], index: 13, kind: input, shape index: {}]
  %s14 = inlined_call_operand.hbm [shape: f32[16,128], index: 14, kind: output, shape index: {}]
  %s15 = sld [smem:[#allocation0]]
  $region98: #{tpu_custom_call.1} parent=0
    _
  %s17 = ssub.s32 1, %s15
  %s18 = scalar_select 0, %s17, %s15
  $region1: #{tpu_custom_call.1} parent=0
    #allocation2 [shape = 'u8[4096]{0}', space=vmem, size = 0x1000, scoped, tag = 'input window, operand 0, single buffered']
    #allocation3 [shape = 's32[1]{0}', space=sflag, size = 0x4, scoped, tag = 'scoped memory for tpu_custom_call.1']
    #allocation4 [shape = 's32[1]{0}', space=sflag, size = 0x4, scoped, tag = 'scoped memory for tpu_custom_call.1']
    #allocation5 [shape = 'u8[4096]{0}', space=vmem, size = 0x1000, scoped, tag = 'input window, operand 1, single buffered']
    #allocation6 [shape = 's32[1]{0}', space=sflag, size = 0x4, scoped, tag = 'scoped memory for tpu_custom_call.1']
    #allocation7 [shape = 'u8[32768]{0}', space=vmem, size = 0x8000, scoped, tag = 'input window, operand 2, single buffered']
    #allocation8 [shape = 'u8[32768]{0}', space=vmem, size = 0x8000, scoped, tag = 'input window, operand 4, single buffered']
    #allocation9 [shape = 's32[1]{0}', space=sflag, size = 0x4, scoped, tag = 'scoped memory for tpu_custom_call.1']
    #allocation10 [shape = 'u8[32768]{0}', space=vmem, size = 0x8000, scoped, tag = 'input window, operand 6, single buffered']
    #allocation11 [shape = 'u8[32768]{0}', space=vmem, size = 0x8000, scoped, tag = 'input window, operand 8, single buffered']
    #allocation12 [shape = 's32[1]{0}', space=sflag, size = 0x4, scoped, tag = 'scoped memory for tpu_custom_call.1']
    #allocation13 [shape = 'u8[32768]{0}', space=vmem, size = 0x8000, scoped, tag = 'input window, operand 10, single buffered']
    #allocation14 [shape = 'u8[32768]{0}', space=vmem, size = 0x8000, scoped, tag = 'input window, operand 12, single buffered']
    #allocation15 [shape = 's32[1]{0}', space=sflag, size = 0x4, scoped, tag = 'scoped memory for tpu_custom_call.1']
    #allocation16 [shape = 'u8[8192]{0}', space=vmem, size = 0x2000, scoped, tag = 'output window, operand 0, single buffered']
    %19 = vsyncpa [#allocation3], 0
    %20 = vsyncpa [#allocation6], 0
    %21 = vsyncpa [#allocation9], 0
    %22 = vsyncpa [#allocation12], 0
    %23 = vsyncpa [#allocation15], 0
    %24 = vsyncpa [#allocation4], 0
    // Predicated region
    $region2: #{tpu_custom_call.1} parent=1 // pred_check
      _
    $region3: #{tpu_custom_call.1} parent=1 // pred_check_branch
      %26 = sbr.rel (0) target = $region5
    $region4: #{tpu_custom_call.1} parent=1 // pred_region
      %s28 = ssub.s32 128, 128
      %29 = vsyncadd [#allocation3], %s28
      %s30 = sshll.u32 [#allocation2], 4
      %s31 = int_to_ptr.vmem [resolvable:$true] %s30
      %36 = dma.hbm_to_vmem [thread:$0]  %s0, 128, %s31, [#allocation3], 64, 64, 4
    $region5: #{tpu_custom_call.1} parent=1 // pred_fallthru
      _
    // Predicated region
    $region6: #{tpu_custom_call.1} parent=1 // pred_check
      _
    $region7: #{tpu_custom_call.1} parent=1 // pred_check_branch
      %38 = sbr.rel (0) target = $region9
    $region8: #{tpu_custom_call.1} parent=1 // pred_region
      %s40 = ssub.s32 128, 128
      %41 = vsyncadd [#allocation6], %s40
      %s42 = sshll.u32 [#allocation5], 4
      %s43 = int_to_ptr.vmem [resolvable:$true] %s42
      %48 = dma.hbm_to_vmem [thread:$0]  %s1, 128, %s43, [#allocation6], 64, 64, 4
    $region9: #{tpu_custom_call.1} parent=1 // pred_fallthru
      _
    // Predicated region
    $region10: #{tpu_custom_call.1} parent=1 // pred_check
      _
    $region11: #{tpu_custom_call.1} parent=1 // pred_check_branch
      %50 = sbr.rel (0) target = $region13
    $region12: #{tpu_custom_call.1} parent=1 // pred_region
      %s52 = ssub.s32 1024, 1024
      %53 = vsyncadd [#allocation6], %s52
      %s54 = sshll.u32 [#allocation7], 4
      %s55 = int_to_ptr.vmem [resolvable:$true] %s54
      %60 = dma.hbm_to_vmem [thread:$0]  %s2, 1024, %s55, [#allocation6], 64, 64, 4
    $region13: #{tpu_custom_call.1} parent=1 // pred_fallthru
      _
    // Predicated region
    $region14: #{tpu_custom_call.1} parent=1 // pred_check
      _
    $region15: #{tpu_custom_call.1} parent=1 // pred_check_branch
      %62 = sbr.rel (0) target = $region17
    $region16: #{tpu_custom_call.1} parent=1 // pred_region
      _
    $region17: #{tpu_custom_call.1} parent=1 // pred_fallthru
      _
    // Predicated region
    $region18: #{tpu_custom_call.1} parent=1 // pred_check
      _
    $region19: #{tpu_custom_call.1} parent=1 // pred_check_branch
      %64 = sbr.rel (0) target = $region21
    $region20: #{tpu_custom_call.1} parent=1 // pred_region
      %s66 = ssub.s32 1024, 1024
      %67 = vsyncadd [#allocation9], %s66
      %s68 = sshll.u32 [#allocation8], 4
      %s69 = int_to_ptr.vmem [resolvable:$true] %s68
      %74 = dma.hbm_to_vmem [thread:$0]  %s4, 1024, %s69, [#allocation9], 64, 64, 4
    $region21: #{tpu_custom_call.1} parent=1 // pred_fallthru
      _
    // Predicated region
    $region22: #{tpu_custom_call.1} parent=1 // pred_check
      _
    $region23: #{tpu_custom_call.1} parent=1 // pred_check_branch
      %76 = sbr.rel (0) target = $region25
    $region24: #{tpu_custom_call.1} parent=1 // pred_region
      _
    $region25: #{tpu_custom_call.1} parent=1 // pred_fallthru
      _
    // Predicated region
    $region26: #{tpu_custom_call.1} parent=1 // pred_check
      _
    $region27: #{tpu_custom_call.1} parent=1 // pred_check_branch
      %78 = sbr.rel (0) target = $region29
    $region28: #{tpu_custom_call.1} parent=1 // pred_region
      %s80 = ssub.s32 1024, 1024
      %81 = vsyncadd [#allocation9], %s80
      %s82 = sshll.u32 [#allocation10], 4
      %s83 = int_to_ptr.vmem [resolvable:$true] %s82
      %88 = dma.hbm_to_vmem [thread:$0]  %s6, 1024, %s83, [#allocation9], 64, 64, 4
    $region29: #{tpu_custom_call.1} parent=1 // pred_fallthru
      _
    // Predicated region
    $region30: #{tpu_custom_call.1} parent=1 // pred_check
      _
    $region31: #{tpu_custom_call.1} parent=1 // pred_check_branch
      %90 = sbr.rel (0) target = $region33
    $region32: #{tpu_custom_call.1} parent=1 // pred_region
      _
    $region33: #{tpu_custom_call.1} parent=1 // pred_fallthru
      _
    // Predicated region
    $region34: #{tpu_custom_call.1} parent=1 // pred_check
      _
    $region35: #{tpu_custom_call.1} parent=1 // pred_check_branch
      %92 = sbr.rel (0) target = $region37
    $region36: #{tpu_custom_call.1} parent=1 // pred_region
      %s94 = ssub.s32 1024, 1024
      %95 = vsyncadd [#allocation12], %s94
      %s96 = sshll.u32 [#allocation11], 4
      %s97 = int_to_ptr.vmem [resolvable:$true] %s96
      %102 = dma.hbm_to_vmem [thread:$0]  %s8, 1024, %s97, [#allocation12], 64, 64, 4
    $region37: #{tpu_custom_call.1} parent=1 // pred_fallthru
      _
    // Predicated region
    $region38: #{tpu_custom_call.1} parent=1 // pred_check
      _
    $region39: #{tpu_custom_call.1} parent=1 // pred_check_branch
      %104 = sbr.rel (0) target = $region41
    $region40: #{tpu_custom_call.1} parent=1 // pred_region
      _
    $region41: #{tpu_custom_call.1} parent=1 // pred_fallthru
      _
    // Predicated region
    $region42: #{tpu_custom_call.1} parent=1 // pred_check
      _
    $region43: #{tpu_custom_call.1} parent=1 // pred_check_branch
      %106 = sbr.rel (0) target = $region45
    $region44: #{tpu_custom_call.1} parent=1 // pred_region
      %s108 = ssub.s32 1024, 1024
      %109 = vsyncadd [#allocation12], %s108
      %s110 = sshll.u32 [#allocation13], 4
      %s111 = int_to_ptr.vmem [resolvable:$true] %s110
      %116 = dma.hbm_to_vmem [thread:$0]  %s10, 1024, %s111, [#allocation12], 64, 64, 4
    $region45: #{tpu_custom_call.1} parent=1 // pred_fallthru
      _
    // Predicated region
    $region46: #{tpu_custom_call.1} parent=1 // pred_check
      _
    $region47: #{tpu_custom_call.1} parent=1 // pred_check_branch
      %118 = sbr.rel (0) target = $region49
    $region48: #{tpu_custom_call.1} parent=1 // pred_region
      _
    $region49: #{tpu_custom_call.1} parent=1 // pred_fallthru
      _
    // Predicated region
    $region50: #{tpu_custom_call.1} parent=1 // pred_check
      _
    $region51: #{tpu_custom_call.1} parent=1 // pred_check_branch
      %120 = sbr.rel (0) target = $region53
    $region52: #{tpu_custom_call.1} parent=1 // pred_region
      %s122 = ssub.s32 1024, 1024
      %123 = vsyncadd [#allocation15], %s122
      %s124 = sshll.u32 [#allocation14], 4
      %s125 = int_to_ptr.vmem [resolvable:$true] %s124
      %130 = dma.hbm_to_vmem [thread:$0]  %s12, 1024, %s125, [#allocation15], 64, 64, 4
    $region53: #{tpu_custom_call.1} parent=1 // pred_fallthru
      _
    // Predicated region
    $region54: #{tpu_custom_call.1} parent=1 // pred_check
      _
    $region55: #{tpu_custom_call.1} parent=1 // pred_check_branch
      %132 = sbr.rel (0) target = $region57
    $region56: #{tpu_custom_call.1} parent=1 // pred_region
      _
    $region57: #{tpu_custom_call.1} parent=1 // pred_fallthru
      _
    // Predicated region
    $region58: #{tpu_custom_call.1} parent=1 // pred_check
      _
    $region59: #{tpu_custom_call.1} parent=1 // pred_check_branch
      %134 = sbr.rel (0) target = $region61
    $region60: #{tpu_custom_call.1} parent=1 // pred_region
      %135 = dma.done [#allocation3], 128
    $region61: #{tpu_custom_call.1} parent=1 // pred_fallthru
      _
    // Predicated region
    $region62: #{tpu_custom_call.1} parent=1 // pred_check
      _
    $region63: #{tpu_custom_call.1} parent=1 // pred_check_branch
      %137 = sbr.rel (0) target = $region65
    $region64: #{tpu_custom_call.1} parent=1 // pred_region
      %138 = dma.done [#allocation6], 128
    $region65: #{tpu_custom_call.1} parent=1 // pred_fallthru
      _
    // Predicated region
    $region66: #{tpu_custom_call.1} parent=1 // pred_check
      _
    $region67: #{tpu_custom_call.1} parent=1 // pred_check_branch
      %140 = sbr.rel (0) target = $region69
    $region68: #{tpu_custom_call.1} parent=1 // pred_region
      %141 = dma.done [#allocation6], 1024
    $region69: #{tpu_custom_call.1} parent=1 // pred_fallthru
      _
    // Predicated region
    $region70: #{tpu_custom_call.1} parent=1 // pred_check
      _
    $region71: #{tpu_custom_call.1} parent=1 // pred_check_branch
      %143 = sbr.rel (0) target = $region73
    $region72: #{tpu_custom_call.1} parent=1 // pred_region
      %144 = dma.done [#allocation9], 1024
    $region73: #{tpu_custom_call.1} parent=1 // pred_fallthru
      _
    // Predicated region
    $region74: #{tpu_custom_call.1} parent=1 // pred_check
      _
    $region75: #{tpu_custom_call.1} parent=1 // pred_check_branch
      %146 = sbr.rel (0) target = $region77
    $region76: #{tpu_custom_call.1} parent=1 // pred_region
      %147 = dma.done [#allocation9], 1024
    $region77: #{tpu_custom_call.1} parent=1 // pred_fallthru
      _
    // Predicated region
    $region78: #{tpu_custom_call.1} parent=1 // pred_check
      _
    $region79: #{tpu_custom_call.1} parent=1 // pred_check_branch
      %149 = sbr.rel (0) target = $region81
    $region80: #{tpu_custom_call.1} parent=1 // pred_region
      %150 = dma.done [#allocation12], 1024
    $region81: #{tpu_custom_call.1} parent=1 // pred_fallthru
      _
    // Predicated region
    $region82: #{tpu_custom_call.1} parent=1 // pred_check
      _
    $region83: #{tpu_custom_call.1} parent=1 // pred_check_branch
      %152 = sbr.rel (0) target = $region85
    $region84: #{tpu_custom_call.1} parent=1 // pred_region
      %153 = dma.done [#allocation12], 1024
    $region85: #{tpu_custom_call.1} parent=1 // pred_fallthru
      _
    // Predicated region
    $region86: #{tpu_custom_call.1} parent=1 // pred_check
      _
    $region87: #{tpu_custom_call.1} parent=1 // pred_check_branch
      %155 = sbr.rel (0) target = $region89
    $region88: #{tpu_custom_call.1} parent=1 // pred_region
      %156 = dma.done [#allocation15], 1024
    $region89: #{tpu_custom_call.1} parent=1 // pred_fallthru
      _
    %v158 = vld [vmem:[#allocation2] sm:$0xf]
    %v159 = vld [vmem:[#allocation2 + $0x4] sm:$0xf]
    %v160 = vld [vmem:[#allocation5] sm:$0xf]
    %v161 = vld [vmem:[#allocation5 + $0x4] sm:$0xf]
    %v162 = vld [vmem:[#allocation7] sm:$0xf]
    %v163 = vld [vmem:[#allocation7 + $0x4] sm:$0xf]
    %v164 = vld [vmem:[#allocation7 + $0x8] sm:$0xf]
    %v165 = vld [vmem:[#allocation7 + $0xc] sm:$0xf]
    %v166 = vld [vmem:[#allocation7 + $0x10] sm:$0xf]
    %v167 = vld [vmem:[#allocation7 + $0x14] sm:$0xf]
    %v168 = vld [vmem:[#allocation7 + $0x18] sm:$0xf]
    %v169 = vld [vmem:[#allocation7 + $0x1c] sm:$0xf]
    %v170 = vld [vmem:[#allocation7 + $0x20] sm:$0xf]
    %v171 = vld [vmem:[#allocation7 + $0x24] sm:$0xf]
    %v172 = vld [vmem:[#allocation7 + $0x28] sm:$0xf]
    %v173 = vld [vmem:[#allocation7 + $0x2c] sm:$0xf]
    %v174 = vld [vmem:[#allocation7 + $0x30] sm:$0xf]
    %v175 = vld [vmem:[#allocation7 + $0x34] sm:$0xf]
    %v176 = vld [vmem:[#allocation7 + $0x38] sm:$0xf]
    %v177 = vld [vmem:[#allocation7 + $0x3c] sm:$0xf]
    %v178 = vld [vmem:[%s3] sm:$0x1]
    %v179 = vld [vmem:[#allocation8] sm:$0xf]
    %v180 = vld [vmem:[#allocation8 + $0x4] sm:$0xf]
    %v181 = vld [vmem:[#allocation8 + $0x8] sm:$0xf]
    %v182 = vld [vmem:[#allocation8 + $0xc] sm:$0xf]
    %v183 = vld [vmem:[#allocation8 + $0x10] sm:$0xf]
    %v184 = vld [vmem:[#allocation8 + $0x14] sm:$0xf]
    %v185 = vld [vmem:[#allocation8 + $0x18] sm:$0xf]
    %v186 = vld [vmem:[#allocation8 + $0x1c] sm:$0xf]
    %v187 = vld [vmem:[#allocation8 + $0x20] sm:$0xf]
    %v188 = vld [vmem:[#allocation8 + $0x24] sm:$0xf]
    %v189 = vld [vmem:[#allocation8 + $0x28] sm:$0xf]
    %v190 = vld [vmem:[#allocation8 + $0x2c] sm:$0xf]
    %v191 = vld [vmem:[#allocation8 + $0x30] sm:$0xf]
    %v192 = vld [vmem:[#allocation8 + $0x34] sm:$0xf]
    %v193 = vld [vmem:[#allocation8 + $0x38] sm:$0xf]
    %v194 = vld [vmem:[#allocation8 + $0x3c] sm:$0xf]
    %v195 = vld [vmem:[%s5] sm:$0x1]
    %v198 = vunpack.c.l.b16 %v158
    %v199 = vunpack.c.l.b16 %v159
    %v200 = vpack.c.b16 %v199, %v198
    %v203 = vunpack.c.l.b16 %v160
    %v204 = vunpack.c.l.b16 %v161
    %v205 = vpack.c.b16 %v204, %v203
    %vm207 = vcmask 130048
    %v209 = vsel %vm207, %v200, 0
    %211 = vmatprep.subr.bf16.mxu0 0
    %212 = vmatpush1.bf16.msra.mxu0 %v205
    %213 = vmatprep.subr.bf16.mxu0 0
    %214 = vmatpush1.bf16.msra.mxu0 0
    %215 = vmatprep.subr.bf16.mxu0 0
    %216 = vmatpush1.bf16.msra.mxu0 0
    %217 = vmatprep.subr.bf16.mxu0 0
    %218 = vmatpush1.bf16.msra.mxu0 0
    %219 = vmatprep.subr.bf16.mxu0 0
    %220 = vmatpush1.bf16.msra.mxu0 0
    %221 = vmatprep.subr.bf16.mxu0 0
    %222 = vmatpush1.bf16.msra.mxu0 0
    %223 = vmatprep.subr.bf16.mxu0 0
    %224 = vmatpush1.bf16.msra.mxu0 0
    %225 = vmatprep.subr.bf16.mxu0 0
    %226 = vmatpush1.bf16.msra.mxu0 0
    %227 = vmatprep.subr.bf16.mxu0 0
    %228 = vmatpush1.bf16.msra.mxu0 0
    %229 = vmatprep.subr.bf16.mxu0 0
    %230 = vmatpush1.bf16.msra.mxu0 0
    %231 = vmatprep.subr.bf16.mxu0 0
    %232 = vmatpush1.bf16.msra.mxu0 0
    %233 = vmatprep.subr.bf16.mxu0 0
    %234 = vmatpush1.bf16.msra.mxu0 0
    %235 = vmatprep.subr.bf16.mxu0 0
    %236 = vmatpush1.bf16.msra.mxu0 0
    %237 = vmatprep.subr.bf16.mxu0 0
    %238 = vmatpush1.bf16.msra.mxu0 0
    %239 = vmatprep.subr.bf16.mxu0 0
    %240 = vmatpush1.bf16.msra.mxu0 0
    %241 = vmatprep.subr.bf16.mxu0 0
    %242 = vmatpush1.bf16.msra.mxu0 0
    %243 = vmatprep.mubr.bf16.mxu0 0
    %244 = vmatmul.mubr.bf16.gmra.mrb[0].mxu0 %v209
    %v245 = vpop.f32.mrb[0].mxu0
    %v246 = vadd.f32 0.0, %v245
    %v247 = vpop.f32.mrb[0].mxu0
    %v248 = vpop.f32.mrb[0].mxu0
    %v249 = vadd.f32 0.0, %v248
    %v250 = vpop.f32.mrb[0].mxu0
    %251 = vdwg.mxu0
    %v252 = vpack.c.bf16 %v249, %v246
    %v254 = vlaneseq
    %v255 = vshrl.u32 %v254, 7
    %v256 = vsub.s32 0, %v255
    %v257 = vrot.slane %v178, %v256
    %v275 = vunpack.c.l.b16 %v162
    %v276 = vunpack.c.l.b16 %v163
    %v277 = vunpack.c.l.b16 %v164
    %v278 = vunpack.c.l.b16 %v165
    %v279 = vunpack.c.l.b16 %v166
    %v280 = vunpack.c.l.b16 %v167
    %v281 = vunpack.c.l.b16 %v168
    %v282 = vunpack.c.l.b16 %v169
    %v283 = vunpack.c.l.b16 %v170
    %v284 = vunpack.c.l.b16 %v171
    %v285 = vunpack.c.l.b16 %v172
    %v286 = vunpack.c.l.b16 %v173
    %v287 = vunpack.c.l.b16 %v174
    %v288 = vunpack.c.l.b16 %v175
    %v289 = vunpack.c.l.b16 %v176
    %v290 = vunpack.c.l.b16 %v177
    %v291 = vpack.c.b16 %v276, %v275
    %v292 = vpack.c.b16 %v278, %v277
    %v293 = vpack.c.b16 %v280, %v279
    %v294 = vpack.c.b16 %v282, %v281
    %v295 = vpack.c.b16 %v284, %v283
    %v296 = vpack.c.b16 %v286, %v285
    %v297 = vpack.c.b16 %v288, %v287
    %v298 = vpack.c.b16 %v290, %v289
    %307 = vmatprep.subr.bf16.mxu0 0
    %308 = vmatpush1.bf16.msra.mxu0 %v291
    %309 = vmatprep.subr.bf16.mxu0 0
    %310 = vmatpush1.bf16.msra.mxu0 %v292
    %311 = vmatprep.subr.bf16.mxu0 0
    %312 = vmatpush1.bf16.msra.mxu0 %v293
    %313 = vmatprep.subr.bf16.mxu0 0
    %314 = vmatpush1.bf16.msra.mxu0 %v294
    %315 = vmatprep.subr.bf16.mxu0 0
    %316 = vmatpush1.bf16.msra.mxu0 %v295
    %317 = vmatprep.subr.bf16.mxu0 0
    %318 = vmatpush1.bf16.msra.mxu0 %v296
    %319 = vmatprep.subr.bf16.mxu0 0
    %320 = vmatpush1.bf16.msra.mxu0 %v297
    %321 = vmatprep.subr.bf16.mxu0 0
    %322 = vmatpush1.bf16.msra.mxu0 %v298
    %323 = vmatprep.subr.bf16.mxu0 0
    %324 = vmatpush1.bf16.msra.mxu0 0
    %325 = vmatprep.subr.bf16.mxu0 0
    %326 = vmatpush1.bf16.msra.mxu0 0
    %327 = vmatprep.subr.bf16.mxu0 0
    %328 = vmatpush1.bf16.msra.mxu0 0
    %329 = vmatprep.subr.bf16.mxu0 0
    %330 = vmatpush1.bf16.msra.mxu0 0
    %331 = vmatprep.subr.bf16.mxu0 0
    %332 = vmatpush1.bf16.msra.mxu0 0
    %333 = vmatprep.subr.bf16.mxu0 0
    %334 = vmatpush1.bf16.msra.mxu0 0
    %335 = vmatprep.subr.bf16.mxu0 0
    %336 = vmatpush1.bf16.msra.mxu0 0
    %337 = vmatprep.subr.bf16.mxu0 0
    %338 = vmatpush1.bf16.msra.mxu0 0
    %339 = vmatprep.mubr.bf16.mxu0 0
    %340 = vmatmul.mubr.bf16.gmra.mrb[0].mxu0 %v252
    %v341 = vpop.f32.mrb[0].mxu0
    %v342 = vadd.f32 %v257, %v341
    %v343 = vpop.f32.mrb[0].mxu0
    %v344 = vpop.f32.mrb[0].mxu0
    %v345 = vadd.f32 %v257, %v344
    %v346 = vpop.f32.mrb[0].mxu0
    %347 = vdwg.mxu0
    %v348 = vmax.f32 %v342, 0.0
    %v349 = vmax.f32 %v345, 0.0
    %v350 = vpack.c.bf16 %v349, %v348
    %v352 = vlaneseq
    %v353 = vshrl.u32 %v352, 7
    %v354 = vsub.s32 0, %v353
    %v355 = vrot.slane %v195, %v354
    %v373 = vunpack.c.l.b16 %v179
    %v374 = vunpack.c.l.b16 %v180
    %v375 = vunpack.c.l.b16 %v181
    %v376 = vunpack.c.l.b16 %v182
    %v377 = vunpack.c.l.b16 %v183
    %v378 = vunpack.c.l.b16 %v184
    %v379 = vunpack.c.l.b16 %v185
    %v380 = vunpack.c.l.b16 %v186
    %v381 = vunpack.c.l.b16 %v187
    %v382 = vunpack.c.l.b16 %v188
    %v383 = vunpack.c.l.b16 %v189
    %v384 = vunpack.c.l.b16 %v190
    %v385 = vunpack.c.l.b16 %v191
    %v386 = vunpack.c.l.b16 %v192
    %v387 = vunpack.c.l.b16 %v193
    %v388 = vunpack.c.l.b16 %v194
    %v389 = vpack.c.b16 %v374, %v373
    %v390 = vpack.c.b16 %v376, %v375
    %v391 = vpack.c.b16 %v378, %v377
    %v392 = vpack.c.b16 %v380, %v379
    %v393 = vpack.c.b16 %v382, %v381
    %v394 = vpack.c.b16 %v384, %v383
    %v395 = vpack.c.b16 %v386, %v385
    %v396 = vpack.c.b16 %v388, %v387
    %405 = vmatprep.subr.bf16.mxu0 0
    %406 = vmatpush1.bf16.msra.mxu0 %v389
    %407 = vmatprep.subr.bf16.mxu0 0
    %408 = vmatpush1.bf16.msra.mxu0 %v390
    %409 = vmatprep.subr.bf16.mxu0 0
    %410 = vmatpush1.bf16.msra.mxu0 %v391
    %411 = vmatprep.subr.bf16.mxu0 0
    %412 = vmatpush1.bf16.msra.mxu0 %v392
    %413 = vmatprep.subr.bf16.mxu0 0
    %414 = vmatpush1.bf16.msra.mxu0 %v393
    %415 = vmatprep.subr.bf16.mxu0 0
    %416 = vmatpush1.bf16.msra.mxu0 %v394
    %417 = vmatprep.subr.bf16.mxu0 0
    %418 = vmatpush1.bf16.msra.mxu0 %v395
    %419 = vmatprep.subr.bf16.mxu0 0
    %420 = vmatpush1.bf16.msra.mxu0 %v396
    %421 = vmatprep.subr.bf16.mxu0 0
    %422 = vmatpush1.bf16.msra.mxu0 0
    %423 = vmatprep.subr.bf16.mxu0 0
    %424 = vmatpush1.bf16.msra.mxu0 0
    %425 = vmatprep.subr.bf16.mxu0 0
    %426 = vmatpush1.bf16.msra.mxu0 0
    %427 = vmatprep.subr.bf16.mxu0 0
    %428 = vmatpush1.bf16.msra.mxu0 0
    %429 = vmatprep.subr.bf16.mxu0 0
    %430 = vmatpush1.bf16.msra.mxu0 0
    %431 = vmatprep.subr.bf16.mxu0 0
    %432 = vmatpush1.bf16.msra.mxu0 0
    %433 = vmatprep.subr.bf16.mxu0 0
    %434 = vmatpush1.bf16.msra.mxu0 0
    %435 = vmatprep.subr.bf16.mxu0 0
    %436 = vmatpush1.bf16.msra.mxu0 0
    %437 = vmatprep.mubr.bf16.mxu0 0
    %438 = vmatmul.mubr.bf16.gmra.mrb[0].mxu0 %v350
    %v439 = vpop.f32.mrb[0].mxu0
    %v440 = vadd.f32 %v355, %v439
    %v441 = vpop.f32.mrb[0].mxu0
    %v442 = vpop.f32.mrb[0].mxu0
    %v443 = vadd.f32 %v355, %v442
    %v444 = vpop.f32.mrb[0].mxu0
    %445 = vdwg.mxu0
    %v446 = vmax.f32 %v440, 0.0
    %v447 = vmax.f32 %v443, 0.0
    %v448 = vadd.f32 %v446, %v447
    %v449 = vrot.slane %v448, 4
    %v450 = vadd.f32 %v448, %v449
    %v451 = vrot.slane %v450, 2
    %v452 = vadd.f32 %v450, %v451
    %v453 = vrot.slane %v452, 1
    %v454 = vadd.f32 %v452, %v453
    %v455 = vmul.f32 %v454, 0.0625
    %v456 = vsub.f32 %v446, %v455
    %v457 = vsub.f32 %v447, %v455
    %v458 = vmul.f32 %v456, %v456
    %v459 = vmul.f32 %v457, %v457
    %460 = vadd.xlane.f32.xlu0 %v458
    %v461 = vpop.xlane.xlu0 %460
    %462 = vadd.xlane.f32.xlu0 %v459
    %v463 = vpop.xlane.xlu0 %462
    %v464 = vadd.f32 %v461, 1e-06
    %v465 = vadd.f32 %v463, 1e-06
    %v466 = vrsqrt.pop %v464
    %v467 = vrsqrt.pop %v465
    %v468 = vmul.f32 %v456, %v466
    %v469 = vmul.f32 %v457, %v467
    %v470 = vld [vmem:[#allocation10] sm:$0xf]
    %v471 = vld [vmem:[#allocation10 + $0x4] sm:$0xf]
    %v472 = vld [vmem:[#allocation10 + $0x8] sm:$0xf]
    %v473 = vld [vmem:[#allocation10 + $0xc] sm:$0xf]
    %v474 = vld [vmem:[#allocation10 + $0x10] sm:$0xf]
    %v475 = vld [vmem:[#allocation10 + $0x14] sm:$0xf]
    %v476 = vld [vmem:[#allocation10 + $0x18] sm:$0xf]
    %v477 = vld [vmem:[#allocation10 + $0x1c] sm:$0xf]
    %v478 = vld [vmem:[#allocation10 + $0x20] sm:$0xf]
    %v479 = vld [vmem:[#allocation10 + $0x24] sm:$0xf]
    %v480 = vld [vmem:[#allocation10 + $0x28] sm:$0xf]
    %v481 = vld [vmem:[#allocation10 + $0x2c] sm:$0xf]
    %v482 = vld [vmem:[#allocation10 + $0x30] sm:$0xf]
    %v483 = vld [vmem:[#allocation10 + $0x34] sm:$0xf]
    %v484 = vld [vmem:[#allocation10 + $0x38] sm:$0xf]
    %v485 = vld [vmem:[#allocation10 + $0x3c] sm:$0xf]
    %v486 = vld [vmem:[%s7] sm:$0x1]
    %v487 = vld [vmem:[#allocation11] sm:$0xf]
    %v488 = vld [vmem:[#allocation11 + $0x4] sm:$0xf]
    %v489 = vld [vmem:[#allocation11 + $0x8] sm:$0xf]
    %v490 = vld [vmem:[#allocation11 + $0xc] sm:$0xf]
    %v491 = vld [vmem:[#allocation11 + $0x10] sm:$0xf]
    %v492 = vld [vmem:[#allocation11 + $0x14] sm:$0xf]
    %v493 = vld [vmem:[#allocation11 + $0x18] sm:$0xf]
    %v494 = vld [vmem:[#allocation11 + $0x1c] sm:$0xf]
    %v495 = vld [vmem:[#allocation11 + $0x20] sm:$0xf]
    %v496 = vld [vmem:[#allocation11 + $0x24] sm:$0xf]
    %v497 = vld [vmem:[#allocation11 + $0x28] sm:$0xf]
    %v498 = vld [vmem:[#allocation11 + $0x2c] sm:$0xf]
    %v499 = vld [vmem:[#allocation11 + $0x30] sm:$0xf]
    %v500 = vld [vmem:[#allocation11 + $0x34] sm:$0xf]
    %v501 = vld [vmem:[#allocation11 + $0x38] sm:$0xf]
    %v502 = vld [vmem:[#allocation11 + $0x3c] sm:$0xf]
    %v503 = vld [vmem:[%s9] sm:$0x1]
    %v504 = vpack.c.bf16 %v469, %v468
    %505 = vmatprep.subr.bf16.mxu0 0
    %506 = vmatpush1.bf16.msra.mxu0 %v504
    %507 = vmatprep.subr.bf16.mxu0 0
    %508 = vmatpush1.bf16.msra.mxu0 0
    %509 = vmatprep.subr.bf16.mxu0 0
    %510 = vmatpush1.bf16.msra.mxu0 0
    %511 = vmatprep.subr.bf16.mxu0 0
    %512 = vmatpush1.bf16.msra.mxu0 0
    %513 = vmatprep.subr.bf16.mxu0 0
    %514 = vmatpush1.bf16.msra.mxu0 0
    %515 = vmatprep.subr.bf16.mxu0 0
    %516 = vmatpush1.bf16.msra.mxu0 0
    %517 = vmatprep.subr.bf16.mxu0 0
    %518 = vmatpush1.bf16.msra.mxu0 0
    %519 = vmatprep.subr.bf16.mxu0 0
    %520 = vmatpush1.bf16.msra.mxu0 0
    %521 = vmatprep.subr.bf16.mxu0 0
    %522 = vmatpush1.bf16.msra.mxu0 0
    %523 = vmatprep.subr.bf16.mxu0 0
    %524 = vmatpush1.bf16.msra.mxu0 0
    %525 = vmatprep.subr.bf16.mxu0 0
    %526 = vmatpush1.bf16.msra.mxu0 0
    %527 = vmatprep.subr.bf16.mxu0 0
    %528 = vmatpush1.bf16.msra.mxu0 0
    %529 = vmatprep.subr.bf16.mxu0 0
    %530 = vmatpush1.bf16.msra.mxu0 0
    %531 = vmatprep.subr.bf16.mxu0 0
    %532 = vmatpush1.bf16.msra.mxu0 0
    %533 = vmatprep.subr.bf16.mxu0 0
    %534 = vmatpush1.bf16.msra.mxu0 0
    %535 = vmatprep.subr.bf16.mxu0 0
    %536 = vmatpush1.bf16.msra.mxu0 0
    %537 = vmatprep.mubr.bf16.mxu0 0
    %538 = vmatmul.mubr.bf16.gmra.mrb[0].mxu0 %v209
    %v539 = vpop.f32.mrb[0].mxu0
    %v540 = vadd.f32 0.0, %v539
    %v541 = vpop.f32.mrb[0].mxu0
    %v542 = vpop.f32.mrb[0].mxu0
    %v543 = vadd.f32 0.0, %v542
    %v544 = vpop.f32.mrb[0].mxu0
    %545 = vdwg.mxu0
    %v546 = vpack.c.bf16 %v543, %v540
    %v548 = vlaneseq
    %v549 = vshrl.u32 %v548, 7
    %v550 = vsub.s32 0, %v549
    %v551 = vrot.slane %v486, %v550
    %v569 = vunpack.c.l.b16 %v470
    %v570 = vunpack.c.l.b16 %v471
    %v571 = vunpack.c.l.b16 %v472
    %v572 = vunpack.c.l.b16 %v473
    %v573 = vunpack.c.l.b16 %v474
    %v574 = vunpack.c.l.b16 %v475
    %v575 = vunpack.c.l.b16 %v476
    %v576 = vunpack.c.l.b16 %v477
    %v577 = vunpack.c.l.b16 %v478
    %v578 = vunpack.c.l.b16 %v479
    %v579 = vunpack.c.l.b16 %v480
    %v580 = vunpack.c.l.b16 %v481
    %v581 = vunpack.c.l.b16 %v482
    %v582 = vunpack.c.l.b16 %v483
    %v583 = vunpack.c.l.b16 %v484
    %v584 = vunpack.c.l.b16 %v485
    %v585 = vpack.c.b16 %v570, %v569
    %v586 = vpack.c.b16 %v572, %v571
    %v587 = vpack.c.b16 %v574, %v573
    %v588 = vpack.c.b16 %v576, %v575
    %v589 = vpack.c.b16 %v578, %v577
    %v590 = vpack.c.b16 %v580, %v579
    %v591 = vpack.c.b16 %v582, %v581
    %v592 = vpack.c.b16 %v584, %v583
    %601 = vmatprep.subr.bf16.mxu0 0
    %602 = vmatpush1.bf16.msra.mxu0 %v585
    %603 = vmatprep.subr.bf16.mxu0 0
    %604 = vmatpush1.bf16.msra.mxu0 %v586
    %605 = vmatprep.subr.bf16.mxu0 0
    %606 = vmatpush1.bf16.msra.mxu0 %v587
    %607 = vmatprep.subr.bf16.mxu0 0
    %608 = vmatpush1.bf16.msra.mxu0 %v588
    %609 = vmatprep.subr.bf16.mxu0 0
    %610 = vmatpush1.bf16.msra.mxu0 %v589
    %611 = vmatprep.subr.bf16.mxu0 0
    %612 = vmatpush1.bf16.msra.mxu0 %v590
    %613 = vmatprep.subr.bf16.mxu0 0
    %614 = vmatpush1.bf16.msra.mxu0 %v591
    %615 = vmatprep.subr.bf16.mxu0 0
    %616 = vmatpush1.bf16.msra.mxu0 %v592
    %617 = vmatprep.subr.bf16.mxu0 0
    %618 = vmatpush1.bf16.msra.mxu0 0
    %619 = vmatprep.subr.bf16.mxu0 0
    %620 = vmatpush1.bf16.msra.mxu0 0
    %621 = vmatprep.subr.bf16.mxu0 0
    %622 = vmatpush1.bf16.msra.mxu0 0
    %623 = vmatprep.subr.bf16.mxu0 0
    %624 = vmatpush1.bf16.msra.mxu0 0
    %625 = vmatprep.subr.bf16.mxu0 0
    %626 = vmatpush1.bf16.msra.mxu0 0
    %627 = vmatprep.subr.bf16.mxu0 0
    %628 = vmatpush1.bf16.msra.mxu0 0
    %629 = vmatprep.subr.bf16.mxu0 0
    %630 = vmatpush1.bf16.msra.mxu0 0
    %631 = vmatprep.subr.bf16.mxu0 0
    %632 = vmatpush1.bf16.msra.mxu0 0
    %633 = vmatprep.mubr.bf16.mxu0 0
    %634 = vmatmul.mubr.bf16.gmra.mrb[0].mxu0 %v546
    %v635 = vpop.f32.mrb[0].mxu0
    %v636 = vadd.f32 %v551, %v635
    %v637 = vpop.f32.mrb[0].mxu0
    %v638 = vpop.f32.mrb[0].mxu0
    %v639 = vadd.f32 %v551, %v638
    %v640 = vpop.f32.mrb[0].mxu0
    %641 = vdwg.mxu0
    %v642 = vmax.f32 %v636, 0.0
    %v643 = vmax.f32 %v639, 0.0
    %v644 = vpack.c.bf16 %v643, %v642
    %v646 = vlaneseq
    %v647 = vshrl.u32 %v646, 7
    %v648 = vsub.s32 0, %v647
    %v649 = vrot.slane %v503, %v648
    %v667 = vunpack.c.l.b16 %v487
    %v668 = vunpack.c.l.b16 %v488
    %v669 = vunpack.c.l.b16 %v489
    %v670 = vunpack.c.l.b16 %v490
    %v671 = vunpack.c.l.b16 %v491
    %v672 = vunpack.c.l.b16 %v492
    %v673 = vunpack.c.l.b16 %v493
    %v674 = vunpack.c.l.b16 %v494
    %v675 = vunpack.c.l.b16 %v495
    %v676 = vunpack.c.l.b16 %v496
    %v677 = vunpack.c.l.b16 %v497
    %v678 = vunpack.c.l.b16 %v498
    %v679 = vunpack.c.l.b16 %v499
    %v680 = vunpack.c.l.b16 %v500
    %v681 = vunpack.c.l.b16 %v501
    %v682 = vunpack.c.l.b16 %v502
    %v683 = vpack.c.b16 %v668, %v667
    %v684 = vpack.c.b16 %v670, %v669
    %v685 = vpack.c.b16 %v672, %v671
    %v686 = vpack.c.b16 %v674, %v673
    %v687 = vpack.c.b16 %v676, %v675
    %v688 = vpack.c.b16 %v678, %v677
    %v689 = vpack.c.b16 %v680, %v679
    %v690 = vpack.c.b16 %v682, %v681
    %699 = vmatprep.subr.bf16.mxu0 0
    %700 = vmatpush1.bf16.msra.mxu0 %v683
    %701 = vmatprep.subr.bf16.mxu0 0
    %702 = vmatpush1.bf16.msra.mxu0 %v684
    %703 = vmatprep.subr.bf16.mxu0 0
    %704 = vmatpush1.bf16.msra.mxu0 %v685
    %705 = vmatprep.subr.bf16.mxu0 0
    %706 = vmatpush1.bf16.msra.mxu0 %v686
    %707 = vmatprep.subr.bf16.mxu0 0
    %708 = vmatpush1.bf16.msra.mxu0 %v687
    %709 = vmatprep.subr.bf16.mxu0 0
    %710 = vmatpush1.bf16.msra.mxu0 %v688
    %711 = vmatprep.subr.bf16.mxu0 0
    %712 = vmatpush1.bf16.msra.mxu0 %v689
    %713 = vmatprep.subr.bf16.mxu0 0
    %714 = vmatpush1.bf16.msra.mxu0 %v690
    %715 = vmatprep.subr.bf16.mxu0 0
    %716 = vmatpush1.bf16.msra.mxu0 0
    %717 = vmatprep.subr.bf16.mxu0 0
    %718 = vmatpush1.bf16.msra.mxu0 0
    %719 = vmatprep.subr.bf16.mxu0 0
    %720 = vmatpush1.bf16.msra.mxu0 0
    %721 = vmatprep.subr.bf16.mxu0 0
    %722 = vmatpush1.bf16.msra.mxu0 0
    %723 = vmatprep.subr.bf16.mxu0 0
    %724 = vmatpush1.bf16.msra.mxu0 0
    %725 = vmatprep.subr.bf16.mxu0 0
    %726 = vmatpush1.bf16.msra.mxu0 0
    %727 = vmatprep.subr.bf16.mxu0 0
    %728 = vmatpush1.bf16.msra.mxu0 0
    %729 = vmatprep.subr.bf16.mxu0 0
    %730 = vmatpush1.bf16.msra.mxu0 0
    %731 = vmatprep.mubr.bf16.mxu0 0
    %732 = vmatmul.mubr.bf16.gmra.mrb[0].mxu0 %v644
    %v733 = vpop.f32.mrb[0].mxu0
    %v734 = vadd.f32 %v649, %v733
    %v735 = vpop.f32.mrb[0].mxu0
    %v736 = vpop.f32.mrb[0].mxu0
    %v737 = vadd.f32 %v649, %v736
    %v738 = vpop.f32.mrb[0].mxu0
    %739 = vdwg.mxu0
    %v740 = vmax.f32 %v734, 0.0
    %v741 = vmax.f32 %v737, 0.0
    %v742 = vadd.f32 %v740, %v741
    %v743 = vrot.slane %v742, 4
    %v744 = vadd.f32 %v742, %v743
    %v745 = vrot.slane %v744, 2
    %v746 = vadd.f32 %v744, %v745
    %v747 = vrot.slane %v746, 1
    %v748 = vadd.f32 %v746, %v747
    %v749 = vmul.f32 %v748, 0.0625
    %v750 = vsub.f32 %v740, %v749
    %v751 = vsub.f32 %v741, %v749
    %v752 = vmul.f32 %v750, %v750
    %v753 = vmul.f32 %v751, %v751
    %754 = vadd.xlane.f32.xlu0 %v752
    %v755 = vpop.xlane.xlu0 %754
    %756 = vadd.xlane.f32.xlu0 %v753
    %v757 = vpop.xlane.xlu0 %756
    %v758 = vadd.f32 %v755, 1e-06
    %v759 = vadd.f32 %v757, 1e-06
    %v760 = vrsqrt.pop %v758
    %v761 = vrsqrt.pop %v759
    %v762 = vmul.f32 %v750, %v760
    %v763 = vmul.f32 %v751, %v761
    %v764 = vld [vmem:[#allocation13] sm:$0xf]
    %v765 = vld [vmem:[#allocation13 + $0x4] sm:$0xf]
    %v766 = vld [vmem:[#allocation13 + $0x8] sm:$0xf]
    %v767 = vld [vmem:[#allocation13 + $0xc] sm:$0xf]
    %v768 = vld [vmem:[#allocation13 + $0x10] sm:$0xf]
    %v769 = vld [vmem:[#allocation13 + $0x14] sm:$0xf]
    %v770 = vld [vmem:[#allocation13 + $0x18] sm:$0xf]
    %v771 = vld [vmem:[#allocation13 + $0x1c] sm:$0xf]
    %v772 = vld [vmem:[#allocation13 + $0x20] sm:$0xf]
    %v773 = vld [vmem:[#allocation13 + $0x24] sm:$0xf]
    %v774 = vld [vmem:[#allocation13 + $0x28] sm:$0xf]
    %v775 = vld [vmem:[#allocation13 + $0x2c] sm:$0xf]
    %v776 = vld [vmem:[#allocation13 + $0x30] sm:$0xf]
    %v777 = vld [vmem:[#allocation13 + $0x34] sm:$0xf]
    %v778 = vld [vmem:[#allocation13 + $0x38] sm:$0xf]
    %v779 = vld [vmem:[#allocation13 + $0x3c] sm:$0xf]
    %v780 = vld [vmem:[%s11] sm:$0x1]
    %v781 = vld [vmem:[#allocation14] sm:$0xf]
    %v782 = vld [vmem:[#allocation14 + $0x4] sm:$0xf]
    %v783 = vld [vmem:[#allocation14 + $0x8] sm:$0xf]
    %v784 = vld [vmem:[#allocation14 + $0xc] sm:$0xf]
    %v785 = vld [vmem:[#allocation14 + $0x10] sm:$0xf]
    %v786 = vld [vmem:[#allocation14 + $0x14] sm:$0xf]
    %v787 = vld [vmem:[#allocation14 + $0x18] sm:$0xf]
    %v788 = vld [vmem:[#allocation14 + $0x1c] sm:$0xf]
    %v789 = vld [vmem:[#allocation14 + $0x20] sm:$0xf]
    %v790 = vld [vmem:[#allocation14 + $0x24] sm:$0xf]
    %v791 = vld [vmem:[#allocation14 + $0x28] sm:$0xf]
    %v792 = vld [vmem:[#allocation14 + $0x2c] sm:$0xf]
    %v793 = vld [vmem:[#allocation14 + $0x30] sm:$0xf]
    %v794 = vld [vmem:[#allocation14 + $0x34] sm:$0xf]
    %v795 = vld [vmem:[#allocation14 + $0x38] sm:$0xf]
    %v796 = vld [vmem:[#allocation14 + $0x3c] sm:$0xf]
    %v797 = vld [vmem:[%s13] sm:$0x1]
    %v798 = vpack.c.bf16 %v763, %v762
    %799 = vmatprep.subr.bf16.mxu0 0
    %800 = vmatpush1.bf16.msra.mxu0 %v798
    %801 = vmatprep.subr.bf16.mxu0 0
    %802 = vmatpush1.bf16.msra.mxu0 0
    %803 = vmatprep.subr.bf16.mxu0 0
    %804 = vmatpush1.bf16.msra.mxu0 0
    %805 = vmatprep.subr.bf16.mxu0 0
    %806 = vmatpush1.bf16.msra.mxu0 0
    %807 = vmatprep.subr.bf16.mxu0 0
    %808 = vmatpush1.bf16.msra.mxu0 0
    %809 = vmatprep.subr.bf16.mxu0 0
    %810 = vmatpush1.bf16.msra.mxu0 0
    %811 = vmatprep.subr.bf16.mxu0 0
    %812 = vmatpush1.bf16.msra.mxu0 0
    %813 = vmatprep.subr.bf16.mxu0 0
    %814 = vmatpush1.bf16.msra.mxu0 0
    %815 = vmatprep.subr.bf16.mxu0 0
    %816 = vmatpush1.bf16.msra.mxu0 0
    %817 = vmatprep.subr.bf16.mxu0 0
    %818 = vmatpush1.bf16.msra.mxu0 0
    %819 = vmatprep.subr.bf16.mxu0 0
    %820 = vmatpush1.bf16.msra.mxu0 0
    %821 = vmatprep.subr.bf16.mxu0 0
    %822 = vmatpush1.bf16.msra.mxu0 0
    %823 = vmatprep.subr.bf16.mxu0 0
    %824 = vmatpush1.bf16.msra.mxu0 0
    %825 = vmatprep.subr.bf16.mxu0 0
    %826 = vmatpush1.bf16.msra.mxu0 0
    %827 = vmatprep.subr.bf16.mxu0 0
    %828 = vmatpush1.bf16.msra.mxu0 0
    %829 = vmatprep.subr.bf16.mxu0 0
    %830 = vmatpush1.bf16.msra.mxu0 0
    %831 = vmatprep.mubr.bf16.mxu0 0
    %832 = vmatmul.mubr.bf16.gmra.mrb[0].mxu0 %v209
    %v833 = vpop.f32.mrb[0].mxu0
    %v834 = vadd.f32 0.0, %v833
    %v835 = vpop.f32.mrb[0].mxu0
    %v836 = vpop.f32.mrb[0].mxu0
    %v837 = vadd.f32 0.0, %v836
    %v838 = vpop.f32.mrb[0].mxu0
    %839 = vdwg.mxu0
    %v840 = vpack.c.bf16 %v837, %v834
    %v842 = vlaneseq
    %v843 = vshrl.u32 %v842, 7
    %v844 = vsub.s32 0, %v843
    %v845 = vrot.slane %v780, %v844
    %v863 = vunpack.c.l.b16 %v764
    %v864 = vunpack.c.l.b16 %v765
    %v865 = vunpack.c.l.b16 %v766
    %v866 = vunpack.c.l.b16 %v767
    %v867 = vunpack.c.l.b16 %v768
    %v868 = vunpack.c.l.b16 %v769
    %v869 = vunpack.c.l.b16 %v770
    %v870 = vunpack.c.l.b16 %v771
    %v871 = vunpack.c.l.b16 %v772
    %v872 = vunpack.c.l.b16 %v773
    %v873 = vunpack.c.l.b16 %v774
    %v874 = vunpack.c.l.b16 %v775
    %v875 = vunpack.c.l.b16 %v776
    %v876 = vunpack.c.l.b16 %v777
    %v877 = vunpack.c.l.b16 %v778
    %v878 = vunpack.c.l.b16 %v779
    %v879 = vpack.c.b16 %v864, %v863
    %v880 = vpack.c.b16 %v866, %v865
    %v881 = vpack.c.b16 %v868, %v867
    %v882 = vpack.c.b16 %v870, %v869
    %v883 = vpack.c.b16 %v872, %v871
    %v884 = vpack.c.b16 %v874, %v873
    %v885 = vpack.c.b16 %v876, %v875
    %v886 = vpack.c.b16 %v878, %v877
    %895 = vmatprep.subr.bf16.mxu0 0
    %896 = vmatpush1.bf16.msra.mxu0 %v879
    %897 = vmatprep.subr.bf16.mxu0 0
    %898 = vmatpush1.bf16.msra.mxu0 %v880
    %899 = vmatprep.subr.bf16.mxu0 0
    %900 = vmatpush1.bf16.msra.mxu0 %v881
    %901 = vmatprep.subr.bf16.mxu0 0
    %902 = vmatpush1.bf16.msra.mxu0 %v882
    %903 = vmatprep.subr.bf16.mxu0 0
    %904 = vmatpush1.bf16.msra.mxu0 %v883
    %905 = vmatprep.subr.bf16.mxu0 0
    %906 = vmatpush1.bf16.msra.mxu0 %v884
    %907 = vmatprep.subr.bf16.mxu0 0
    %908 = vmatpush1.bf16.msra.mxu0 %v885
    %909 = vmatprep.subr.bf16.mxu0 0
    %910 = vmatpush1.bf16.msra.mxu0 %v886
    %911 = vmatprep.subr.bf16.mxu0 0
    %912 = vmatpush1.bf16.msra.mxu0 0
    %913 = vmatprep.subr.bf16.mxu0 0
    %914 = vmatpush1.bf16.msra.mxu0 0
    %915 = vmatprep.subr.bf16.mxu0 0
    %916 = vmatpush1.bf16.msra.mxu0 0
    %917 = vmatprep.subr.bf16.mxu0 0
    %918 = vmatpush1.bf16.msra.mxu0 0
    %919 = vmatprep.subr.bf16.mxu0 0
    %920 = vmatpush1.bf16.msra.mxu0 0
    %921 = vmatprep.subr.bf16.mxu0 0
    %922 = vmatpush1.bf16.msra.mxu0 0
    %923 = vmatprep.subr.bf16.mxu0 0
    %924 = vmatpush1.bf16.msra.mxu0 0
    %925 = vmatprep.subr.bf16.mxu0 0
    %926 = vmatpush1.bf16.msra.mxu0 0
    %927 = vmatprep.mubr.bf16.mxu0 0
    %928 = vmatmul.mubr.bf16.gmra.mrb[0].mxu0 %v840
    %v929 = vpop.f32.mrb[0].mxu0
    %v930 = vadd.f32 %v845, %v929
    %v931 = vpop.f32.mrb[0].mxu0
    %v932 = vpop.f32.mrb[0].mxu0
    %v933 = vadd.f32 %v845, %v932
    %v934 = vpop.f32.mrb[0].mxu0
    %935 = vdwg.mxu0
    %v936 = vmax.f32 %v930, 0.0
    %v937 = vmax.f32 %v933, 0.0
    %v938 = vpack.c.bf16 %v937, %v936
    %v940 = vlaneseq
    %v941 = vshrl.u32 %v940, 7
    %v942 = vsub.s32 0, %v941
    %v943 = vrot.slane %v797, %v942
    %v961 = vunpack.c.l.b16 %v781
    %v962 = vunpack.c.l.b16 %v782
    %v963 = vunpack.c.l.b16 %v783
    %v964 = vunpack.c.l.b16 %v784
    %v965 = vunpack.c.l.b16 %v785
    %v966 = vunpack.c.l.b16 %v786
    %v967 = vunpack.c.l.b16 %v787
    %v968 = vunpack.c.l.b16 %v788
    %v969 = vunpack.c.l.b16 %v789
    %v970 = vunpack.c.l.b16 %v790
    %v971 = vunpack.c.l.b16 %v791
    %v972 = vunpack.c.l.b16 %v792
    %v973 = vunpack.c.l.b16 %v793
    %v974 = vunpack.c.l.b16 %v794
    %v975 = vunpack.c.l.b16 %v795
    %v976 = vunpack.c.l.b16 %v796
    %v977 = vpack.c.b16 %v962, %v961
    %v978 = vpack.c.b16 %v964, %v963
    %v979 = vpack.c.b16 %v966, %v965
    %v980 = vpack.c.b16 %v968, %v967
    %v981 = vpack.c.b16 %v970, %v969
    %v982 = vpack.c.b16 %v972, %v971
    %v983 = vpack.c.b16 %v974, %v973
    %v984 = vpack.c.b16 %v976, %v975
    %993 = vmatprep.subr.bf16.mxu0 0
    %994 = vmatpush1.bf16.msra.mxu0 %v977
    %995 = vmatprep.subr.bf16.mxu0 0
    %996 = vmatpush1.bf16.msra.mxu0 %v978
    %997 = vmatprep.subr.bf16.mxu0 0
    %998 = vmatpush1.bf16.msra.mxu0 %v979
    %999 = vmatprep.subr.bf16.mxu0 0
    %1000 = vmatpush1.bf16.msra.mxu0 %v980
    %1001 = vmatprep.subr.bf16.mxu0 0
    %1002 = vmatpush1.bf16.msra.mxu0 %v981
    %1003 = vmatprep.subr.bf16.mxu0 0
    %1004 = vmatpush1.bf16.msra.mxu0 %v982
    %1005 = vmatprep.subr.bf16.mxu0 0
    %1006 = vmatpush1.bf16.msra.mxu0 %v983
    %1007 = vmatprep.subr.bf16.mxu0 0
    %1008 = vmatpush1.bf16.msra.mxu0 %v984
    %1009 = vmatprep.subr.bf16.mxu0 0
    %1010 = vmatpush1.bf16.msra.mxu0 0
    %1011 = vmatprep.subr.bf16.mxu0 0
    %1012 = vmatpush1.bf16.msra.mxu0 0
    %1013 = vmatprep.subr.bf16.mxu0 0
    %1014 = vmatpush1.bf16.msra.mxu0 0
    %1015 = vmatprep.subr.bf16.mxu0 0
    %1016 = vmatpush1.bf16.msra.mxu0 0
    %1017 = vmatprep.subr.bf16.mxu0 0
    %1018 = vmatpush1.bf16.msra.mxu0 0
    %1019 = vmatprep.subr.bf16.mxu0 0
    %1020 = vmatpush1.bf16.msra.mxu0 0
    %1021 = vmatprep.subr.bf16.mxu0 0
    %1022 = vmatpush1.bf16.msra.mxu0 0
    %1023 = vmatprep.subr.bf16.mxu0 0
    %1024 = vmatpush1.bf16.msra.mxu0 0
    %1025 = vmatprep.mubr.bf16.mxu0 0
    %1026 = vmatmul.mubr.bf16.gmra.mrb[0].mxu0 %v938
    %v1027 = vpop.f32.mrb[0].mxu0
    %v1028 = vadd.f32 %v943, %v1027
    %v1029 = vpop.f32.mrb[0].mxu0
    %v1030 = vpop.f32.mrb[0].mxu0
    %v1031 = vadd.f32 %v943, %v1030
    %v1032 = vpop.f32.mrb[0].mxu0
    %1033 = vdwg.mxu0
    %v1034 = vadd.f32 %v1028, %v1031
    %v1035 = vrot.slane %v1034, 4
    %v1036 = vadd.f32 %v1034, %v1035
    %v1037 = vrot.slane %v1036, 2
    %v1038 = vadd.f32 %v1036, %v1037
    %v1039 = vrot.slane %v1038, 1
    %v1040 = vadd.f32 %v1038, %v1039
    %v1041 = vmul.f32 %v1040, 0.0625
    %v1042 = vsub.f32 %v1028, %v1041
    %v1043 = vsub.f32 %v1031, %v1041
    %v1044 = vmul.f32 %v1042, %v1042
    %v1045 = vmul.f32 %v1043, %v1043
    %1046 = vadd.xlane.f32.xlu0 %v1044
    %v1047 = vpop.xlane.xlu0 %1046
    %1048 = vadd.xlane.f32.xlu0 %v1045
    %v1049 = vpop.xlane.xlu0 %1048
    %v1050 = vadd.f32 %v1047, 1e-06
    %v1051 = vadd.f32 %v1049, 1e-06
    %v1052 = vrsqrt.pop %v1050
    %v1053 = vrsqrt.pop %v1051
    %v1054 = vmul.f32 %v1042, %v1052
    %v1055 = vmul.f32 %v1043, %v1053
    %v1056 = vsub.f32 0.0, %v1054
    %v1057 = vsub.f32 0.0, %v1055
    %v1058 = vmul.f32 %v1056, 1.442695
    %v1059 = vpow.pop %v1058
    %v1060 = vmul.f32 %v1057, 1.442695
    %v1061 = vpow.pop %v1060
    %v1062 = vadd.f32 %v1059, 1.0
    %v1063 = vadd.f32 %v1061, 1.0
    %v1064 = vrcp.pop %v1062
    %v1065 = vrcp.pop %v1063
    %1066 = vst [vmem:[#allocation16] sm:$0xff] %v1064
    %1067 = vst [vmem:[#allocation16 + $0x8] sm:$0xff] %v1065
    // Predicated region
    $region90: #{tpu_custom_call.1} parent=1 // pred_check
      _
    $region91: #{tpu_custom_call.1} parent=1 // pred_check_branch
      %1069 = sbr.rel (0) target = $region93
    $region92: #{tpu_custom_call.1} parent=1 // pred_region
      %s1071 = ssub.s32 256, 256
      %1072 = vsyncadd [#allocation4], %s1071
      %s1073 = sshll.u32 [#allocation16], 4
      %s1074 = int_to_ptr.vmem [resolvable:$true] %s1073
      %1079 = dma.vmem_to_hbm [thread:$0]  %s1074, 256, %s14, [#allocation4], 128, 128, 8
    $region93: #{tpu_custom_call.1} parent=1 // pred_fallthru
      _
    // Predicated region
    $region94: #{tpu_custom_call.1} parent=1 // pred_check
      _
    $region95: #{tpu_custom_call.1} parent=1 // pred_check_branch
      %1081 = sbr.rel (0) target = $region97
    $region96: #{tpu_custom_call.1} parent=1 // pred_region
      %1082 = dma.done [#allocation4], 256
    $region97: #{tpu_custom_call.1} parent=1 // pred_fallthru
      _
    %1083 = vsyncpa [#allocation3], 1
    %1084 = vsyncpa [#allocation6], 1
    %1085 = vsyncpa [#allocation9], 1
    %1086 = vsyncpa [#allocation12], 1
    %1087 = vsyncpa [#allocation15], 1
    %1088 = vsyncpa [#allocation4], 1

</llo_original>
